<compile_context>
chip_gen: v6e
topology: v6e:2x2x1
jax: 0.10.0
libtpu: 0.0.40
codegen_flags: <defaults>
</compile_context>

<pallas_src>
import jax
import jax.numpy as jnp
from jax.experimental import pallas as pl
from jax.experimental.pallas import tpu as pltpu

_LABEL_SMOOTHING = 0.1
_LANES = 128
_MAX_ROWS = 512            # rows (of 128 lanes) per grid step -> 64K samples/step


def _round_up(n, m):
    return (n + m - 1) // m * m


def _cdiv(a, b):
    return (a + b - 1) // b


def _tile_cfg(n):
    """Row tiling: rows of 128 lanes; row-tile is a multiple of 8 (sublane-dense)."""
    rows = _cdiv(n, _LANES)
    rows8 = _round_up(rows, 8)                    # pad to one (8, 128) vreg tile
    grid_n = _cdiv(rows8, _MAX_ROWS)
    rows_tile = _round_up(_cdiv(rows8, grid_n), 8)
    rows_pad = rows_tile * grid_n
    return rows_tile, rows_pad, grid_n


def _logit_diff_terms(x0, x1):
    """2-class log-softmax from the logit difference, softplus form (no selects).

    logp1 = -softplus(-d), logp0 = -softplus(d), d = x1 - x0.
    One exp + one log per sample on the EUP; everything else is VPU elementwise.
    """
    d = x1 - x0
    # log(1 + e) with e = exp(-|d|) in (0, 1]: argument in (1, 2], never overflows.
    log1pe = jnp.log(1.0 + jnp.exp(-jnp.abs(d)))
    logp1 = -(jnp.maximum(-d, 0.0) + log1pe)
    logp0 = -(jnp.maximum(d, 0.0) + log1pe)
    return logp0, logp1


def _softmax_p1_kernel(x_ref, p1_ref):
    # inference path (labels is None): only p1 = softmax(x)[:, 1] leaves the kernel
    x0 = x_ref[0]
    x1 = x_ref[1]
    _, logp1 = _logit_diff_terms(x0, x1)
    p1_ref[...] = jnp.exp(logp1)                  # EUP; p0 = 1 - p1 in the wrapper


def _loss_kernel(x_ref, lab_ref, p1_ref, loss_ref):
    x0 = x_ref[0]                                 # (R, 128) f32, sublane+lane dense
    x1 = x_ref[1]
    labels = lab_ref[...]                         # (R, 128) i32, -1 == padding

    logp0, logp1 = _logit_diff_terms(x0, x1)
    p1_ref[...] = jnp.exp(logp1)                  # the only full-size output stream

    eps = _LABEL_SMOOTHING
    valid = (labels >= 0).astype(jnp.float32)     # mask out padded samples
    # label-smoothed CE without a one-hot (C == 2):
    #   per_col = -((1-eps) * logp[label] + (eps/C) * (logp0 + logp1))
    logp_lab = jnp.where(labels == 1, logp1, logp0)
    per_col = -((1.0 - eps) * logp_lab + (eps * 0.5) * (logp0 + logp1))
    # sublane-only partial reduction -> full-lane (1, 128) unmasked store per tile;
    # the wrapper finishes the sum, so the grid axis stays 'parallel'.
    loss_ref[...] = jnp.sum(per_col * valid, axis=0, keepdims=True)


def _pack_logits(x, rows_pad):
    n = x.shape[0]
    n_pad = rows_pad * _LANES
    xt = jnp.pad(x.astype(jnp.float32).T, ((0, 0), (0, n_pad - n)))
    return xt.reshape(2, rows_pad, _LANES)


def lossav_forward(x, labels=None):
    """Pallas TPU equivalent of lossAV.forward."""
    N, C = x.shape
    assert C == 2, "lossAV is a binary (speaking / not-speaking) head"
    rows_tile, rows_pad, grid_n = _tile_cfg(N)
    n_pad = rows_pad * _LANES

    xp = _pack_logits(x, rows_pad)                # (2, rows_pad, 128)
    x_spec = pl.BlockSpec((2, rows_tile, _LANES), lambda i: (0, i, 0))
    p1_spec = pl.BlockSpec((rows_tile, _LANES), lambda i: (i, 0))
    params = pltpu.CompilerParams(dimension_semantics=("parallel",))

    if labels is None:
        p1 = pl.pallas_call(
            _softmax_p1_kernel,
            grid=(grid_n,),
            in_specs=[x_spec],
            out_specs=p1_spec,
            out_shape=jax.ShapeDtypeStruct((rows_pad, _LANES), jnp.float32),
            compiler_params=params,
        )(xp)
        p1 = p1.reshape(-1)[:N]
        return jnp.stack([1.0 - p1, p1], axis=-1)             # (N, 2)

    # labels kept i32: an i8 stream would require a (32, 128) sublane tile, which
    # the adaptive row-tile (multiple of 8, not of 32) does not guarantee.
    lab = jnp.pad(labels.astype(jnp.int32), (0, n_pad - N),
                  constant_values=-1).reshape(rows_pad, _LANES)

    p1, loss_p = pl.pallas_call(
        _loss_kernel,
        grid=(grid_n,),
        in_specs=[x_spec, pl.BlockSpec((rows_tile, _LANES), lambda i: (i, 0))],
        out_specs=(
            p1_spec,                                           # softmax(x)[:, 1]
            pl.BlockSpec((1, _LANES), lambda i: (0, i)),       # per-tile loss rows
        ),
        out_shape=(
            jax.ShapeDtypeStruct((rows_pad, _LANES), jnp.float32),
            jax.ShapeDtypeStruct((1, grid_n * _LANES), jnp.float32),
        ),
        compiler_params=params,
    )(xp, lab)

    # Fused wrapper epilogue over the real (unpadded) batch.
    nloss = jnp.sum(loss_p) / N
    p1 = p1.reshape(-1)[:N]
    predScore = jnp.stack([1.0 - p1, p1], axis=-1)             # (N, 2)
    predLabel = jnp.round(p1)                                  # (N,)
    correctNum = jnp.sum(
        (predLabel == labels.astype(jnp.float32)).astype(jnp.float32))
    # TODO(synk): for tiny batches this remains launch-overhead dominated; in
    # production fuse it as the finalize phase of the producing FC matmul kernel.
    return nloss, predScore, predLabel, correctNum


def _reference(x, labels):
    # pure-JAX reference of the PyTorch semantics, for a correctness check
    N, C = x.shape
    logp = jax.nn.log_softmax(x, axis=-1)
    p = jax.nn.softmax(x, axis=-1)
    eps = _LABEL_SMOOTHING
    onehot = jax.nn.one_hot(labels, C, dtype=jnp.float32)
    q = (1.0 - eps) * onehot + eps / C
    nloss = jnp.mean(-jnp.sum(q * logp, axis=-1))
    plabel = jnp.round(p)[:, 1]
    correct = jnp.sum((plabel == labels.astype(jnp.float32)).astype(jnp.float32))
    return nloss, p, plabel, correct


if __name__ == "__main__":
    key = jax.random.PRNGKey(0)

    # N=8: small shape consistent with the module (binary ASD head, (N, 2) logits).
    # N=3000: exercises the padding mask within a single sublane-dense tile.
    # N=70000: exercises the multi-step grid (2 row-tiles of 280 rows).
    for N in (8, 3000, 70000):
        key, kx, kl = jax.random.split(key, 3)
        x = jax.random.normal(kx, (N, 2), dtype=jnp.float32)
        labels = jax.random.randint(kl, (N,), 0, 2, dtype=jnp.int32)

        # labeled path
        nloss, predScore, predLabel, correctNum = lossav_forward(x, labels)
        jax.block_until_ready((nloss, predScore, predLabel, correctNum))

        # inference path (labels == None)
        predScore_only = lossav_forward(x)
        jax.block_until_ready(predScore_only)

        # sanity check vs pure-JAX reference
        r_loss, r_score, r_plabel, r_correct = _reference(x, labels)
        assert jnp.allclose(nloss, r_loss, atol=1e-5), (nloss, r_loss)
        assert jnp.allclose(predScore, r_score, atol=1e-5)
        assert jnp.allclose(predScore_only, r_score, atol=1e-5)
        # predLabel / correctNum can only legitimately differ where the softmax is
        # within float noise of exactly 0.5; exclude those (measure-zero) samples.
        unambig = jnp.abs(r_score[:, 1] - 0.5) > 1e-5
        assert bool(jnp.all(jnp.where(unambig, predLabel == r_plabel, True)))
        n_amb = float(jnp.sum(jnp.logical_not(unambig)))
        assert abs(float(correctNum) - float(r_correct)) <= n_amb

    print("KERNEL_OK")
</pallas_src>

<mosaic_0001>
module attributes {stable_mosaic.version = 11 : i64} {
  func.func @_loss_kernel(%arg0: i32, %arg1: memref<2x8x128xf32, #tpu.memory_space<vmem>>, %arg2: memref<8x128xi32, #tpu.memory_space<vmem>>, %arg3: memref<8x128xf32, #tpu.memory_space<vmem>>, %arg4: memref<1x128xf32, #tpu.memory_space<vmem>>) attributes {dimension_semantics = [#tpu.dimension_semantics<parallel>], iteration_bounds = array<i64: 1>, scalar_prefetch = 0 : i64, scratch_operands = 0 : i64, tpu.core_type = #tpu.core_type<tc>, window_params = [{transform_indices = @transform_0, window_bounds = array<i64: 2, 8, 128>}, {transform_indices = @transform_1, window_bounds = array<i64: 8, 128>}, {transform_indices = @transform_2, window_bounds = array<i64: 8, 128>}, {transform_indices = @transform_3, window_bounds = array<i64: 1, 128>}]} {
    %c0 = arith.constant 0 : index
    %c0_0 = arith.constant 0 : index
    %c0_1 = arith.constant 0 : index
    %0 = vector.load %arg1[%c0, %c0_0, %c0_1] : memref<2x8x128xf32, #tpu.memory_space<vmem>>, vector<1x8x128xf32>
    %1 = vector.shape_cast %0 : vector<1x8x128xf32> to vector<8x128xf32>
    %c1 = arith.constant 1 : index
    %c0_2 = arith.constant 0 : index
    %c0_3 = arith.constant 0 : index
    %2 = vector.load %arg1[%c1, %c0_2, %c0_3] : memref<2x8x128xf32, #tpu.memory_space<vmem>>, vector<1x8x128xf32>
    %3 = vector.shape_cast %2 : vector<1x8x128xf32> to vector<8x128xf32>
    %c0_4 = arith.constant 0 : index
    %c0_5 = arith.constant 0 : index
    %4 = vector.load %arg2[%c0_4, %c0_5] : memref<8x128xi32, #tpu.memory_space<vmem>>, vector<8x128xi32>
    %5 = arith.subf %3, %1 : vector<8x128xf32>
    %6 = math.absf %5 : vector<8x128xf32>
    %cst = arith.constant 0.000000e+00 : f32
    %7 = vector.broadcast %cst : f32 to vector<8x128xf32>
    %8 = arith.subf %7, %6 : vector<8x128xf32>
    %9 = math.exp %8 : vector<8x128xf32>
    %cst_6 = arith.constant 1.000000e+00 : f32
    %10 = vector.broadcast %cst_6 : f32 to vector<8x128xf32>
    %11 = arith.addf %10, %9 : vector<8x128xf32>
    %12 = math.log %11 : vector<8x128xf32>
    %cst_7 = arith.constant 0.000000e+00 : f32
    %13 = vector.broadcast %cst_7 : f32 to vector<8x128xf32>
    %14 = arith.subf %13, %5 : vector<8x128xf32>
    %cst_8 = arith.constant 0.000000e+00 : f32
    %15 = vector.broadcast %cst_8 : f32 to vector<8x128xf32>
    %16 = arith.maximumf %14, %15 : vector<8x128xf32>
    %17 = arith.addf %16, %12 : vector<8x128xf32>
    %cst_9 = arith.constant 0.000000e+00 : f32
    %18 = vector.broadcast %cst_9 : f32 to vector<8x128xf32>
    %19 = arith.subf %18, %17 : vector<8x128xf32>
    %cst_10 = arith.constant 0.000000e+00 : f32
    %20 = vector.broadcast %cst_10 : f32 to vector<8x128xf32>
    %21 = arith.maximumf %5, %20 : vector<8x128xf32>
    %22 = arith.addf %21, %12 : vector<8x128xf32>
    %cst_11 = arith.constant 0.000000e+00 : f32
    %23 = vector.broadcast %cst_11 : f32 to vector<8x128xf32>
    %24 = arith.subf %23, %22 : vector<8x128xf32>
    %25 = math.exp %19 : vector<8x128xf32>
    %c0_12 = arith.constant 0 : index
    %c0_13 = arith.constant 0 : index
    %26 = vector.load %arg3[%c0_12, %c0_13] : memref<8x128xf32, #tpu.memory_space<vmem>>, vector<8x128xf32>
    tpu.vector_store %arg3[%c0_12, %c0_13], %25 {strides = array<i32>} : memref<8x128xf32, #tpu.memory_space<vmem>>, vector<8x128xf32>,
    %c0_i32 = arith.constant 0 : i32
    %27 = vector.broadcast %c0_i32 : i32 to vector<8x128xi32>
    %28 = arith.cmpi sge, %4, %27 : vector<8x128xi32>
    %29 = arith.extui %28 : vector<8x128xi1> to vector<8x128xi32>
    %30 = arith.sitofp %29 : vector<8x128xi32> to vector<8x128xf32>
    %c1_i32 = arith.constant 1 : i32
    %31 = vector.broadcast %c1_i32 : i32 to vector<8x128xi32>
    %32 = arith.cmpi eq, %4, %31 : vector<8x128xi32>
    %33 = arith.select %32, %19, %24 : vector<8x128xi1>, vector<8x128xf32>
    %cst_14 = arith.constant 0.899999976 : f32
    %34 = vector.broadcast %cst_14 : f32 to vector<8x128xf32>
    %35 = arith.mulf %34, %33 : vector<8x128xf32>
    %36 = arith.addf %24, %19 : vector<8x128xf32>
    %cst_15 = arith.constant 5.000000e-02 : f32
    %37 = vector.broadcast %cst_15 : f32 to vector<8x128xf32>
    %38 = arith.mulf %37, %36 : vector<8x128xf32>
    %39 = arith.addf %35, %38 : vector<8x128xf32>
    %cst_16 = arith.constant 0.000000e+00 : f32
    %40 = vector.broadcast %cst_16 : f32 to vector<8x128xf32>
    %41 = arith.subf %40, %39 : vector<8x128xf32>
    %42 = arith.mulf %41, %30 : vector<8x128xf32>
    %cst_17 = arith.constant dense<0.000000e+00> : vector<128xf32>
    %43 = vector.multi_reduction <add>, %42, %cst_17 [0] : vector<8x128xf32> to vector<128xf32>
    %44 = vector.shape_cast %43 : vector<128xf32> to vector<1x128xf32>
    %c0_18 = arith.constant 0 : index
    %c0_19 = arith.constant 0 : index
    %45 = vector.load %arg4[%c0_18, %c0_19] : memref<1x128xf32, #tpu.memory_space<vmem>>, vector<1x128xf32>
    tpu.vector_store %arg4[%c0_18, %c0_19], %44 {strides = array<i32>} : memref<1x128xf32, #tpu.memory_space<vmem>>, vector<1x128xf32>,
    return
  }
  func.func @transform_0(%arg0: i32) -> (i32, i32, i32) {
    %c0_i32 = arith.constant 0 : i32
    %c0_i32_0 = arith.constant 0 : i32
    %c0_i32_1 = arith.constant 0 : i32
    return %c0_i32, %arg0, %c0_i32_0 : i32, i32, i32
  }
  func.func @transform_1(%arg0: i32) -> (i32, i32) {
    %c0_i32 = arith.constant 0 : i32
    %c0_i32_0 = arith.constant 0 : i32
    return %arg0, %c0_i32 : i32, i32
  }
  func.func @transform_2(%arg0: i32) -> (i32, i32) {
    %c0_i32 = arith.constant 0 : i32
    %c0_i32_0 = arith.constant 0 : i32
    return %arg0, %c0_i32 : i32, i32
  }
  func.func @transform_3(%arg0: i32) -> (i32, i32) {
    %c0_i32 = arith.constant 0 : i32
    %c0_i32_0 = arith.constant 0 : i32
    return %c0_i32, %arg0 : i32, i32
  }
}

</mosaic_0001>

<llo_original>
// kernel: tpu_custom_call.1
$region0: #{tpu_custom_call.1}
  #allocation0 [shape = 'u32[]', space=smem, size = 0x4, offset = 0x4, fixed_abs, tag = 'smem constant byte address 0x4 - core index']
  #allocation1 [shape = 'u32[144,128]{1,0:T(1,128)}', space=vmem, size = 0x12000, scoped, tag = 'internal scratch']
  %s0 = inlined_call_operand.hbm [shape: f32[2,8,128], index: 0, kind: input, shape index: {}]
  %s1 = inlined_call_operand.hbm [shape: s32[8,128], index: 1, kind: input, shape index: {}]
  %s2 = inlined_call_operand.hbm [shape: f32[8,128], index: 2, kind: output, shape index: {0}]
  %s3 = inlined_call_operand.hbm [shape: f32[1,128], index: 3, kind: output, shape index: {1}]
  %4 = xla_tuple %s2, %s3
  %s5 = sld [smem:[#allocation0]]
  $region34: #{tpu_custom_call.1} parent=0
    _
  %s7 = ssub.s32 1, %s5
  %s8 = scalar_select 0, %s7, %s5
  $region1: #{tpu_custom_call.1} parent=0
    #allocation2 [shape = 'u8[8192]{0}', space=vmem, size = 0x2000, scoped, tag = 'input window, operand 0, single buffered']
    #allocation3 [shape = 's32[1]{0}', space=sflag, size = 0x4, scoped, tag = 'scoped memory for tpu_custom_call.1']
    #allocation4 [shape = 's32[1]{0}', space=sflag, size = 0x4, scoped, tag = 'scoped memory for tpu_custom_call.1']
    #allocation5 [shape = 'u8[4096]{0}', space=vmem, size = 0x1000, scoped, tag = 'input window, operand 1, single buffered']
    #allocation6 [shape = 's32[1]{0}', space=sflag, size = 0x4, scoped, tag = 'scoped memory for tpu_custom_call.1']
    #allocation7 [shape = 'u8[4096]{0}', space=vmem, size = 0x1000, scoped, tag = 'output window, operand 0, single buffered']
    #allocation8 [shape = 'u8[512]{0}', space=vmem, size = 0x400, scoped, tag = 'output window, operand 1, single buffered']
    #allocation9 [shape = 's32[1]{0}', space=sflag, size = 0x4, scoped, tag = 'scoped memory for tpu_custom_call.1']
    %9 = vsyncpa [#allocation3], 0
    %10 = vsyncpa [#allocation6], 0
    %11 = vsyncpa [#allocation4], 0
    %12 = vsyncpa [#allocation9], 0
    // Predicated region
    $region2: #{tpu_custom_call.1} parent=1 // pred_check
      _
    $region3: #{tpu_custom_call.1} parent=1 // pred_check_branch
      %14 = sbr.rel (0) target = $region5
    $region4: #{tpu_custom_call.1} parent=1 // pred_region
      %s16 = ssub.s32 256, 256
      %17 = vsyncadd [#allocation3], %s16
      %s18 = sshll.u32 [#allocation2], 4
      %s19 = int_to_ptr.vmem [resolvable:$true] %s18
      %24 = dma.hbm_to_vmem [thread:$0]  %s0, 256, %s19, [#allocation3], 128, 128, 8
    $region5: #{tpu_custom_call.1} parent=1 // pred_fallthru
      _
    // Predicated region
    $region6: #{tpu_custom_call.1} parent=1 // pred_check
      _
    $region7: #{tpu_custom_call.1} parent=1 // pred_check_branch
      %26 = sbr.rel (0) target = $region9
    $region8: #{tpu_custom_call.1} parent=1 // pred_region
      %s28 = ssub.s32 128, 128
      %29 = vsyncadd [#allocation6], %s28
      %s31 = sshll.u32 [#allocation5], 4
      %s32 = int_to_ptr.vmem [resolvable:$true] %s31
      %34 = dma.hbm_to_vmem [thread:$0]  %s1, 128, %s32, [#allocation6]
    $region9: #{tpu_custom_call.1} parent=1 // pred_fallthru
      _
    // Predicated region
    $region10: #{tpu_custom_call.1} parent=1 // pred_check
      _
    $region11: #{tpu_custom_call.1} parent=1 // pred_check_branch
      %36 = sbr.rel (0) target = $region13
    $region12: #{tpu_custom_call.1} parent=1 // pred_region
      %37 = dma.done [#allocation3], 256
    $region13: #{tpu_custom_call.1} parent=1 // pred_fallthru
      _
    // Predicated region
    $region14: #{tpu_custom_call.1} parent=1 // pred_check
      _
    $region15: #{tpu_custom_call.1} parent=1 // pred_check_branch
      %39 = sbr.rel (0) target = $region17
    $region16: #{tpu_custom_call.1} parent=1 // pred_region
      %40 = dma.done [#allocation6], 128
    $region17: #{tpu_custom_call.1} parent=1 // pred_fallthru
      _
    %v41 = vld [vmem:[#allocation2] sm:$0xff]
    %s42 = scalar_lea.vmem [#allocation2], 8
    %v43 = vld [vmem:[%s42] sm:$0xff]
    %v44 = vld [vmem:[#allocation5] sm:$0xff]
    %v45 = vsub.f32 %v43, %v41
    %v46 = vand.u32 2147483647, %v45
    %v47 = vsub.f32 0.0, %v46
    %v48 = vmul.f32 %v47, 1.442695
    %v49 = vpow.pop %v48
    %v50 = vadd.f32 %v49, 1.0
    %v51 = vlog2.pop %v50
    %v52 = vmul.f32 %v51, 0.6931472
    %v53 = vsub.f32 0.0, %v45
    %v54 = vmax.f32 %v53, 0.0
    %v55 = vadd.f32 %v54, %v52
    %v56 = vsub.f32 0.0, %v55
    %v57 = vmax.f32 %v45, 0.0
    %v58 = vadd.f32 %v57, %v52
    %v59 = vsub.f32 0.0, %v58
    %v60 = vmul.f32 %v56, 1.442695
    %v61 = vpow.pop %v60
    %62 = vst [vmem:[#allocation7] sm:$0xff] %v61
    %vm63 = vcmp.ge.s32.totalorder %v44, 0
    %v64 = vsel %vm63, 1, 0
    %v65 = vcvt.s32.f32 %v64
    %vm66 = vcmp.eq.s32.totalorder %v44, 1
    %v67 = vsel %vm66, %v56, %v59
    %v68 = vmul.f32 %v67, 0.9
    %v69 = vadd.f32 %v59, %v56
    %v70 = vmul.f32 %v69, 0.05
    %v71 = vadd.f32 %v68, %v70
    %v72 = vsub.f32 0.0, %v71
    %v73 = vmul.f32 %v72, %v65
    %v74 = vrot.slane %v73, 4
    %v75 = vadd.f32 %v73, %v74
    %v76 = vrot.slane %v75, 2
    %v77 = vadd.f32 %v75, %v76
    %v78 = vrot.slane %v77, 1
    %v79 = vadd.f32 %v77, %v78
    %80 = vst [vmem:[#allocation8] sm:$0x1] %v79
    // Predicated region
    $region18: #{tpu_custom_call.1} parent=1 // pred_check
      _
    $region19: #{tpu_custom_call.1} parent=1 // pred_check_branch
      %82 = sbr.rel (0) target = $region21
    $region20: #{tpu_custom_call.1} parent=1 // pred_region
      %s84 = ssub.s32 128, 128
      %85 = vsyncadd [#allocation4], %s84
      %s87 = sshll.u32 [#allocation7], 4
      %s88 = int_to_ptr.vmem [resolvable:$true] %s87
      %90 = dma.vmem_to_hbm [thread:$0]  %s88, 128, %s2, [#allocation4]
    $region21: #{tpu_custom_call.1} parent=1 // pred_fallthru
      _
    // Predicated region
    $region22: #{tpu_custom_call.1} parent=1 // pred_check
      _
    $region23: #{tpu_custom_call.1} parent=1 // pred_check_branch
      %92 = sbr.rel (0) target = $region25
    $region24: #{tpu_custom_call.1} parent=1 // pred_region
      %s94 = ssub.s32 16, 16
      %95 = vsyncadd [#allocation9], %s94
      %s97 = sshll.u32 [#allocation8], 4
      %s98 = int_to_ptr.vmem [resolvable:$true] %s97
      %100 = dma.vmem_to_hbm [thread:$0]  %s98, 16, %s3, [#allocation9]
    $region25: #{tpu_custom_call.1} parent=1 // pred_fallthru
      _
    // Predicated region
    $region26: #{tpu_custom_call.1} parent=1 // pred_check
      _
    $region27: #{tpu_custom_call.1} parent=1 // pred_check_branch
      %102 = sbr.rel (0) target = $region29
    $region28: #{tpu_custom_call.1} parent=1 // pred_region
      %103 = dma.done [#allocation4], 128
    $region29: #{tpu_custom_call.1} parent=1 // pred_fallthru
      _
    // Predicated region
    $region30: #{tpu_custom_call.1} parent=1 // pred_check
      _
    $region31: #{tpu_custom_call.1} parent=1 // pred_check_branch
      %105 = sbr.rel (0) target = $region33
    $region32: #{tpu_custom_call.1} parent=1 // pred_region
      %106 = dma.done [#allocation9], 16
    $region33: #{tpu_custom_call.1} parent=1 // pred_fallthru
      _
    %107 = vsyncpa [#allocation3], 1
    %108 = vsyncpa [#allocation6], 1
    %109 = vsyncpa [#allocation4], 1
    %110 = vsyncpa [#allocation9], 1

</llo_original>
